<compile_context>
chip_gen: v7x
topology: tpu7x:2x2x1
jax: 0.10.0
libtpu: 0.0.40
codegen_flags: <defaults>
</compile_context>

<pallas_src>
import jax
import jax.numpy as jnp
from jax import lax
from jax.experimental import pallas as pl
from jax.experimental.pallas import tpu as pltpu

NEGPOS_RATIO = 3
_INF_BITS = 0x7F800000  # int32 bit pattern of float32 +inf


# ----------------------------- Pallas kernel --------------------------------
def ssd_loss_kernel(num_neg_ref,        # SMEM (1,) int32       (scalar prefetch)
                    p_ref,              # VMEM (Bb, 4+C, P) f32  [loc | conf], P on lanes
                    loc_t_ref,          # VMEM (Bb, 4, P)   f32
                    conf_t_ref,         # VMEM (Bb, 1, P)   int32
                    out_ref):           # VMEM (1, 1, 128)  f32  per-block partial sums
    full = p_ref[...]                                  # (Bb, 4+C, P)
    Bb, _, P = full.shape
    loc_p = full[:, :4, :]                             # (Bb, 4, P)
    conf = full[:, 4:, :]                              # (Bb, C, P)
    C = conf.shape[1]
    tgt = conf_t_ref[...]                              # (Bb, 1, P) int32

    pos = tgt[:, 0, :] > 0                             # (Bb, P)
    posf = pos.astype(jnp.float32)

    # ---- localisation: SmoothL1 sum over positive priors (mean applied in epilogue) ----
    d = loc_p - loc_t_ref[...]                         # (Bb, 4, P)
    ad = jnp.abs(d)
    sl1 = jnp.where(ad < 1.0, 0.5 * d * d, ad - 0.5)   # (Bb, 4, P)
    loc_sum = jnp.sum(jnp.sum(sl1, axis=1) * posf)

    # ---- per-prior confidence loss: logsumexp(conf) - conf[target] (fused shift) ----
    m = jnp.max(conf, axis=1, keepdims=True)           # (Bb, 1, P)  sublane reduce over C
    shifted = conf - m                                 # reused for exp-sum AND gather
    sum_exp = jnp.sum(jnp.exp(shifted), axis=1)        # (Bb, P)
    cls_iota = lax.broadcasted_iota(jnp.int32, (Bb, C, P), 1)
    gathered_sh = jnp.sum(jnp.where(cls_iota == tgt, shifted, 0.0), axis=1)   # (Bb, P)
    per_prior = jnp.log(sum_exp) - gathered_sh         # (Bb, P), always >= 0
    loss_c = jnp.where(pos, 0.0, per_prior)            # positives zeroed (as in torch)

    # ---- hard negative mining: exact bisection for the num_neg-th largest loss/row ----
    # loss_c >= 0, so its f32 bit pattern is monotone in the value; a 32-step integer
    # bisection finds the exact order statistic.  neg = loss_c >= kth_largest is exactly
    # the strict-greater rank test (rank < num_neg).  O(P log) instead of O(P^2).
    bits = pltpu.bitcast(loss_c, jnp.int32)            # (Bb, P)
    num_neg = num_neg_ref[0]
    k = jnp.maximum(num_neg, 1)                        # guard k=0; masked out below

    lo0 = jnp.zeros((Bb, 1), jnp.int32)                # count(bits >= lo) >= k always
    hi0 = jnp.full((Bb, 1), _INF_BITS, jnp.int32)      # count(bits >= hi) <  k always

    def bisect(_, carry):
        lo, hi = carry
        mid = lo + ((hi - lo) >> 1)
        cnt = jnp.sum((bits >= mid).astype(jnp.int32), axis=-1, keepdims=True)  # (Bb,1)
        ge = cnt >= k
        return jnp.where(ge, mid, lo), jnp.where(ge, hi, mid)

    lo, _ = lax.fori_loop(0, 32, bisect, (lo0, hi0))
    neg = jnp.logical_and(bits >= lo, num_neg > 0)     # (Bb, P)

    sel = jnp.logical_or(pos, neg).astype(jnp.float32)
    conf_sum = jnp.sum(per_prior * sel)
    sel_cnt = jnp.sum(sel)

    # lane-dense per-block partials: [loc_sum, conf_sum, sel_cnt, 0, ...]
    lane = lax.broadcasted_iota(jnp.int32, (1, 1, 128), 2)
    out_ref[...] = jnp.where(lane == 0, loc_sum,
                     jnp.where(lane == 1, conf_sum,
                       jnp.where(lane == 2, sel_cnt, 0.0)))


# ----------------------------- plain-JAX glue --------------------------------
def prior_box(grid=8, sizes=(0.2, 0.35)):
    step = 1.0 / grid
    cs = (jnp.arange(grid, dtype=jnp.float32) + 0.5) * step
    cx, cy = jnp.meshgrid(cs, cs, indexing="xy")
    boxes = []
    for s in sizes:
        x1, y1 = cx - s / 2.0, cy - s / 2.0
        x2, y2 = cx + s / 2.0, cy + s / 2.0
        boxes.append(jnp.stack([x1, y1, x2, y2], axis=-1).reshape(-1, 4))
    return jnp.clip(jnp.concatenate(boxes, axis=0), 0.0, 1.0)   # (grid*grid*len(sizes), 4)


def _iou(a, b):
    lt = jnp.maximum(a[:, None, :2], b[None, :, :2])
    rb = jnp.minimum(a[:, None, 2:], b[None, :, 2:])
    wh = jnp.clip(rb - lt, 0.0, None)
    inter = wh[..., 0] * wh[..., 1]
    area_a = (a[:, 2] - a[:, 0]) * (a[:, 3] - a[:, 1])
    area_b = (b[:, 2] - b[:, 0]) * (b[:, 3] - b[:, 1])
    return inter / (area_a[:, None] + area_b[None, :] - inter)


def _encode(matched, priors, variances=(0.1, 0.2)):
    p_c = (priors[:, :2] + priors[:, 2:]) / 2.0
    p_wh = priors[:, 2:] - priors[:, :2]
    m_c = (matched[:, :2] + matched[:, 2:]) / 2.0
    m_wh = matched[:, 2:] - matched[:, :2]
    g_c = (m_c - p_c) / (variances[0] * p_wh)
    g_wh = jnp.log(m_wh / p_wh) / variances[1]
    return jnp.concatenate([g_c, g_wh], axis=1)


def match(gts, labels, priors, threshold=0.5):
    ov = _iou(gts, priors)                       # (n_obj, P)
    best_gt_iou = ov.max(axis=0)
    best_gt_idx = ov.argmax(axis=0)
    best_prior_idx = ov.argmax(axis=1)           # best prior for each gt
    best_gt_iou = best_gt_iou.at[best_prior_idx].set(2.0)
    best_gt_idx = best_gt_idx.at[best_prior_idx].set(jnp.arange(gts.shape[0]))
    matched = gts[best_gt_idx]
    labs = jnp.where(best_gt_iou < threshold, 0.0, labels[best_gt_idx])
    return _encode(matched, priors), labs


def _pick_block_batch(B, max_bb=8):
    """Images per grid step: largest divisor of B <= max_bb that keeps >= 2 grid
    steps (so dimension_semantics=('parallel',) can still shard across 2 TCs)."""
    best = 1
    for bb in range(1, min(B, max_bb) + 1):
        if B % bb == 0 and (B // bb >= 2 or B <= 1):
            best = bb
    return best


def ssd_layer_forward(p, targets, priors, block_batch=None):
    """p: (B, P, 4 + C) f32; targets: list of (n_obj, 5) [label, x1, y1, x2, y2]."""
    B, P, F = p.shape
    C = F - 4
    # TODO(synk): real SSD prior counts (e.g. 8732) need padding to a multiple of 128
    # plus masking of the padded priors out of loss_c / sel; not needed for this demo.
    assert P % 128 == 0, "num_priors must be a multiple of 128"

    # ---- matching (vmapped over the batch when all images have the same n_obj) ----
    n_objs = {int(t.shape[0]) for t in targets}
    if len(n_objs) == 1:
        tstack = jnp.stack(targets)                                   # (B, n_obj, 5)
        loc_t, conf_t = jax.vmap(
            lambda t: match(t[:, 1:], t[:, 0], priors, 0.5))(tstack)
    else:
        rows = [match(t[:, 1:], t[:, 0], priors, 0.5) for t in targets]
        loc_t = jnp.stack([r[0] for r in rows])
        conf_t = jnp.stack([r[1] for r in rows])

    conf_t_i = conf_t.astype(jnp.int32)                               # (B, P) labels
    num_pos = jnp.sum((conf_t_i > 0).astype(jnp.int32))               # batch total (torch)
    num_neg = jnp.minimum(NEGPOS_RATIO * num_pos, P - num_pos).astype(jnp.int32)

    # ---- lane-dense layouts (prior axis last = 128-lane axis); one transpose of p ----
    p_t = jnp.transpose(p, (0, 2, 1)).astype(jnp.float32)             # (B, 4+C, P)
    loc_t_t = jnp.transpose(loc_t, (0, 2, 1)).astype(jnp.float32)     # (B, 4, P)
    conf_t_3 = conf_t_i[:, None, :]                                   # (B, 1, P)

    Bb = block_batch or _pick_block_batch(B)
    assert B % Bb == 0
    G = B // Bb

    # VMEM sizing: double-buffered inputs = 2 * block_bytes; raise the scoped limit
    # only when blocks get big (keep headroom for v7x's 64 MiB physical VMEM).
    block_bytes = Bb * P * 4 * ((4 + C) + 4 + 1)
    vmem_limit = None
    if 2 * block_bytes > 24 * (1 << 20):
        vmem_limit = min(4 * block_bytes + (8 << 20), 100 << 20)

    partials = pl.pallas_call(
        ssd_loss_kernel,
        out_shape=jax.ShapeDtypeStruct((G, 1, 128), jnp.float32),
        grid_spec=pltpu.PrefetchScalarGridSpec(
            num_scalar_prefetch=1,
            grid=(G,),
            in_specs=[
                pl.BlockSpec((Bb, 4 + C, P), lambda g, nn: (g, 0, 0)),
                pl.BlockSpec((Bb, 4, P), lambda g, nn: (g, 0, 0)),
                pl.BlockSpec((Bb, 1, P), lambda g, nn: (g, 0, 0)),
            ],
            out_specs=pl.BlockSpec((1, 1, 128), lambda g, nn: (g, 0, 0)),
        ),
        compiler_params=pltpu.CompilerParams(
            dimension_semantics=("parallel",),
            vmem_limit_bytes=vmem_limit,
        ),
    )(num_neg[None], p_t, loc_t_t, conf_t_3)

    # ---- tiny scalar epilogue (same normalisation as the torch module) ----
    loc_sum = jnp.sum(partials[:, 0, 0])
    conf_sum = jnp.sum(partials[:, 0, 1])
    sel_cnt = jnp.sum(partials[:, 0, 2])
    num_pos_f = num_pos.astype(jnp.float32)
    # Note: num_pos == 0 yields NaN exactly as the reference module would.
    return loc_sum / (num_pos_f * 4.0) + conf_sum / sel_cnt


# --------------------------------- demo --------------------------------------
if __name__ == "__main__":
    key = jax.random.PRNGKey(0)

    priors = prior_box()                  # (128, 4) — plays the role of PriorBox()()
    num_priors = priors.shape[0]          # 128
    num_classes = 7                       # conf dim = num_classes + 1 = 8 (class 0 = bg)
    B = 2
    C = num_classes + 1

    p = jax.random.normal(key, (B, num_priors, 4 + C), dtype=jnp.float32)

    # targets: [label, x1, y1, x2, y2] per object, per image (labels in 1..num_classes)
    targets = [
        jnp.array([[1.0, 0.10, 0.10, 0.40, 0.45],
                   [3.0, 0.55, 0.50, 0.90, 0.95]], dtype=jnp.float32),
        jnp.array([[2.0, 0.05, 0.55, 0.35, 0.90],
                   [5.0, 0.60, 0.05, 0.95, 0.45]], dtype=jnp.float32),
    ]

    loss = ssd_layer_forward(p, targets, priors)
    jax.block_until_ready(loss)
    print("KERNEL_OK")
</pallas_src>

<mosaic_0001>
module attributes {stable_mosaic.version = 11 : i64} {
  func.func @ssd_loss_kernel(%arg0: i32, %arg1: memref<1xi32, #tpu.memory_space<smem>>, %arg2: memref<1x12x128xf32, #tpu.memory_space<vmem>>, %arg3: memref<1x4x128xf32, #tpu.memory_space<vmem>>, %arg4: memref<1x1x128xi32, #tpu.memory_space<vmem>>, %arg5: memref<1x1x128xf32, #tpu.memory_space<vmem>>) attributes {dimension_semantics = [#tpu.dimension_semantics<parallel>], iteration_bounds = array<i64: 2>, scalar_prefetch = 1 : i64, scratch_operands = 0 : i64, tpu.core_type = #tpu.core_type<tc>, window_params = [{transform_indices = @transform_0, window_bounds = array<i64: 1, 12, 128>}, {transform_indices = @transform_1, window_bounds = array<i64: 1, 4, 128>}, {transform_indices = @transform_2, window_bounds = array<i64: 1, 1, 128>}, {transform_indices = @transform_3, window_bounds = array<i64: 1, 1, 128>}]} {
    %c0 = arith.constant 0 : index
    %c0_0 = arith.constant 0 : index
    %c0_1 = arith.constant 0 : index
    %0 = vector.load %arg2[%c0, %c0_0, %c0_1] : memref<1x12x128xf32, #tpu.memory_space<vmem>>, vector<1x12x128xf32>
    %1 = vector.extract_strided_slice %0 {offsets = [0, 0, 0], sizes = [1, 4, 128], strides = [1, 1, 1]} : vector<1x12x128xf32> to vector<1x4x128xf32>
    %2 = vector.extract_strided_slice %0 {offsets = [0, 4, 0], sizes = [1, 8, 128], strides = [1, 1, 1]} : vector<1x12x128xf32> to vector<1x8x128xf32>
    %c0_2 = arith.constant 0 : index
    %c0_3 = arith.constant 0 : index
    %c0_4 = arith.constant 0 : index
    %3 = vector.load %arg4[%c0_2, %c0_3, %c0_4] : memref<1x1x128xi32, #tpu.memory_space<vmem>>, vector<1x1x128xi32>
    %4 = vector.shape_cast %3 : vector<1x1x128xi32> to vector<1x128xi32>
    %c0_i32 = arith.constant 0 : i32
    %5 = vector.broadcast %c0_i32 : i32 to vector<1x128xi32>
    %6 = arith.cmpi sgt, %4, %5 : vector<1x128xi32>
    %7 = arith.extui %6 : vector<1x128xi1> to vector<1x128xi32>
    %8 = arith.sitofp %7 : vector<1x128xi32> to vector<1x128xf32>
    %c0_5 = arith.constant 0 : index
    %c0_6 = arith.constant 0 : index
    %c0_7 = arith.constant 0 : index
    %9 = vector.load %arg3[%c0_5, %c0_6, %c0_7] : memref<1x4x128xf32, #tpu.memory_space<vmem>>, vector<1x4x128xf32>
    %10 = arith.subf %1, %9 : vector<1x4x128xf32>
    %11 = math.absf %10 : vector<1x4x128xf32>
    %cst = arith.constant 1.000000e+00 : f32
    %12 = vector.broadcast %cst : f32 to vector<1x4x128xf32>
    %13 = arith.cmpf olt, %11, %12 : vector<1x4x128xf32>
    %cst_8 = arith.constant 5.000000e-01 : f32
    %14 = vector.broadcast %cst_8 : f32 to vector<1x4x128xf32>
    %15 = arith.mulf %14, %10 : vector<1x4x128xf32>
    %16 = arith.mulf %15, %10 : vector<1x4x128xf32>
    %cst_9 = arith.constant 5.000000e-01 : f32
    %17 = vector.broadcast %cst_9 : f32 to vector<1x4x128xf32>
    %18 = arith.subf %11, %17 : vector<1x4x128xf32>
    %19 = arith.select %13, %16, %18 : vector<1x4x128xi1>, vector<1x4x128xf32>
    %cst_10 = arith.constant dense<0.000000e+00> : vector<1x128xf32>
    %20 = vector.multi_reduction <add>, %19, %cst_10 [1] : vector<1x4x128xf32> to vector<1x128xf32>
    %21 = arith.mulf %20, %8 : vector<1x128xf32>
    %22 = vector.shape_cast %21 : vector<1x128xf32> to vector<1x1x128xf32>
    %cst_11 = arith.constant dense<0.000000e+00> : vector<1xf32>
    %23 = vector.multi_reduction <add>, %22, %cst_11 [1, 2] : vector<1x1x128xf32> to vector<1xf32>
    %24 = vector.shape_cast %23 : vector<1xf32> to vector<1x1x1xf32>
    %25 = vector.extract %24[0, 0, 0] : f32 from vector<1x1x1xf32>
    %cst_12 = arith.constant dense<0xFF800000> : vector<1x128xf32>
    %26 = vector.multi_reduction <maximumf>, %2, %cst_12 [1] : vector<1x8x128xf32> to vector<1x128xf32>
    %27 = vector.shape_cast %26 : vector<1x128xf32> to vector<1x1x128xf32>
    %28 = vector.broadcast %27 : vector<1x1x128xf32> to vector<1x8x128xf32>
    %29 = arith.subf %2, %28 : vector<1x8x128xf32>
    %30 = math.exp %29 : vector<1x8x128xf32>
    %cst_13 = arith.constant dense<0.000000e+00> : vector<1x128xf32>
    %31 = vector.multi_reduction <add>, %30, %cst_13 [1] : vector<1x8x128xf32> to vector<1x128xf32>
    %32 = tpu.iota {dimensions = array<i32: 1>} : vector<1x8x128xi32>
    %33 = vector.broadcast %3 : vector<1x1x128xi32> to vector<1x8x128xi32>
    %34 = arith.cmpi eq, %32, %33 : vector<1x8x128xi32>
    %cst_14 = arith.constant 0.000000e+00 : f32
    %35 = vector.broadcast %cst_14 : f32 to vector<1x8x128xf32>
    %36 = arith.select %34, %29, %35 : vector<1x8x128xi1>, vector<1x8x128xf32>
    %cst_15 = arith.constant dense<0.000000e+00> : vector<1x128xf32>
    %37 = vector.multi_reduction <add>, %36, %cst_15 [1] : vector<1x8x128xf32> to vector<1x128xf32>
    %38 = math.log %31 : vector<1x128xf32>
    %39 = arith.subf %38, %37 : vector<1x128xf32>
    %cst_16 = arith.constant 0.000000e+00 : f32
    %40 = vector.broadcast %cst_16 : f32 to vector<1x128xf32>
    %41 = arith.select %6, %40, %39 : vector<1x128xi1>, vector<1x128xf32>
    %42 = tpu.bitcast %41 : vector<1x128xf32> -> vector<1x128xi32>
    %c0_17 = arith.constant 0 : index
    %43 = memref.load %arg1[%c0_17] : memref<1xi32, #tpu.memory_space<smem>>
    %c1_i32 = arith.constant 1 : i32
    %44 = arith.maxsi %43, %c1_i32 : i32
    %c0_i32_18 = arith.constant 0 : i32
    %45 = vector.broadcast %c0_i32_18 : i32 to vector<1x1xi32>
    %c2139095040_i32 = arith.constant 2139095040 : i32
    %46 = vector.broadcast %c2139095040_i32 : i32 to vector<1x1xi32>
    %c0_i32_19 = arith.constant 0 : i32
    %c32_i32 = arith.constant 32 : i32
    %47 = arith.addi %c0_i32_19, %c32_i32 : i32
    %c1_i32_20 = arith.constant 1 : i32
    %48:2 = scf.for %arg6 = %c0_i32_19 to %47 step %c1_i32_20 iter_args(%arg7 = %45, %arg8 = %46) -> (vector<1x1xi32>, vector<1x1xi32>)  : i32 {
      %81 = arith.subi %arg8, %arg7 : vector<1x1xi32>
      %c1_i32_30 = arith.constant 1 : i32
      %82 = vector.broadcast %c1_i32_30 : i32 to vector<1x1xi32>
      %83 = arith.shrsi %81, %82 : vector<1x1xi32>
      %84 = arith.addi %arg7, %83 : vector<1x1xi32>
      %85 = vector.broadcast %84 : vector<1x1xi32> to vector<1x128xi32>
      %86 = arith.cmpi sge, %42, %85 : vector<1x128xi32>
      %87 = arith.extui %86 : vector<1x128xi1> to vector<1x128xi32>
      %cst_31 = arith.constant dense<0> : vector<1xi32>
      %88 = vector.multi_reduction <add>, %87, %cst_31 [1] : vector<1x128xi32> to vector<1xi32>
      %89 = vector.shape_cast %88 : vector<1xi32> to vector<1x1xi32>
      %90 = vector.broadcast %44 : i32 to vector<1x1xi32>
      %91 = arith.cmpi sge, %89, %90 : vector<1x1xi32>
      %92 = arith.select %91, %84, %arg7 : vector<1x1xi1>, vector<1x1xi32>
      %93 = arith.select %91, %arg8, %84 : vector<1x1xi1>, vector<1x1xi32>
      scf.yield %92, %93 : vector<1x1xi32>, vector<1x1xi32>
    }
    %49 = vector.broadcast %48#0 : vector<1x1xi32> to vector<1x128xi32>
    %50 = arith.cmpi sge, %42, %49 : vector<1x128xi32>
    %c0_i32_21 = arith.constant 0 : i32
    %51 = arith.cmpi sgt, %43, %c0_i32_21 : i32
    %52 = vector.broadcast %51 : i1 to vector<1x128xi1>
    %53 = arith.andi %50, %52 : vector<1x128xi1>
    %54 = arith.ori %6, %53 : vector<1x128xi1>
    %55 = arith.extui %54 : vector<1x128xi1> to vector<1x128xi32>
    %56 = arith.sitofp %55 : vector<1x128xi32> to vector<1x128xf32>
    %57 = arith.mulf %39, %56 : vector<1x128xf32>
    %58 = vector.shape_cast %57 : vector<1x128xf32> to vector<1x1x128xf32>
    %cst_22 = arith.constant dense<0.000000e+00> : vector<1xf32>
    %59 = vector.multi_reduction <add>, %58, %cst_22 [1, 2] : vector<1x1x128xf32> to vector<1xf32>
    %60 = vector.shape_cast %59 : vector<1xf32> to vector<1x1x1xf32>
    %61 = vector.extract %60[0, 0, 0] : f32 from vector<1x1x1xf32>
    %62 = vector.shape_cast %56 : vector<1x128xf32> to vector<1x1x128xf32>
    %cst_23 = arith.constant dense<0.000000e+00> : vector<1xf32>
    %63 = vector.multi_reduction <add>, %62, %cst_23 [1, 2] : vector<1x1x128xf32> to vector<1xf32>
    %64 = vector.shape_cast %63 : vector<1xf32> to vector<1x1x1xf32>
    %65 = vector.extract %64[0, 0, 0] : f32 from vector<1x1x1xf32>
    %66 = tpu.iota {dimensions = array<i32: 2>} : vector<1x1x128xi32>
    %c0_i32_24 = arith.constant 0 : i32
    %67 = vector.broadcast %c0_i32_24 : i32 to vector<1x1x128xi32>
    %68 = arith.cmpi eq, %66, %67 : vector<1x1x128xi32>
    %c1_i32_25 = arith.constant 1 : i32
    %69 = vector.broadcast %c1_i32_25 : i32 to vector<1x1x128xi32>
    %70 = arith.cmpi eq, %66, %69 : vector<1x1x128xi32>
    %c2_i32 = arith.constant 2 : i32
    %71 = vector.broadcast %c2_i32 : i32 to vector<1x1x128xi32>
    %72 = arith.cmpi eq, %66, %71 : vector<1x1x128xi32>
    %cst_26 = arith.constant 0.000000e+00 : f32
    %73 = vector.broadcast %65 : f32 to vector<1x1x128xf32>
    %74 = vector.broadcast %cst_26 : f32 to vector<1x1x128xf32>
    %75 = arith.select %72, %73, %74 : vector<1x1x128xi1>, vector<1x1x128xf32>
    %76 = vector.broadcast %61 : f32 to vector<1x1x128xf32>
    %77 = arith.select %70, %76, %75 : vector<1x1x128xi1>, vector<1x1x128xf32>
    %78 = vector.broadcast %25 : f32 to vector<1x1x128xf32>
    %79 = arith.select %68, %78, %77 : vector<1x1x128xi1>, vector<1x1x128xf32>
    %c0_27 = arith.constant 0 : index
    %c0_28 = arith.constant 0 : index
    %c0_29 = arith.constant 0 : index
    %80 = vector.load %arg5[%c0_27, %c0_28, %c0_29] : memref<1x1x128xf32, #tpu.memory_space<vmem>>, vector<1x1x128xf32>
    tpu.vector_store %arg5[%c0_27, %c0_28, %c0_29], %79 {strides = array<i32>} : memref<1x1x128xf32, #tpu.memory_space<vmem>>, vector<1x1x128xf32>,
    return
  }
  func.func @transform_0(%arg0: i32, %arg1: memref<1xi32, #tpu.memory_space<smem>>) -> (i32, i32, i32) {
    %c0_i32 = arith.constant 0 : i32
    %c0_i32_0 = arith.constant 0 : i32
    %c0_i32_1 = arith.constant 0 : i32
    return %arg0, %c0_i32, %c0_i32_0 : i32, i32, i32
  }
  func.func @transform_1(%arg0: i32, %arg1: memref<1xi32, #tpu.memory_space<smem>>) -> (i32, i32, i32) {
    %c0_i32 = arith.constant 0 : i32
    %c0_i32_0 = arith.constant 0 : i32
    %c0_i32_1 = arith.constant 0 : i32
    return %arg0, %c0_i32, %c0_i32_0 : i32, i32, i32
  }
  func.func @transform_2(%arg0: i32, %arg1: memref<1xi32, #tpu.memory_space<smem>>) -> (i32, i32, i32) {
    %c0_i32 = arith.constant 0 : i32
    %c0_i32_0 = arith.constant 0 : i32
    %c0_i32_1 = arith.constant 0 : i32
    return %arg0, %c0_i32, %c0_i32_0 : i32, i32, i32
  }
  func.func @transform_3(%arg0: i32, %arg1: memref<1xi32, #tpu.memory_space<smem>>) -> (i32, i32, i32) {
    %c0_i32 = arith.constant 0 : i32
    %c0_i32_0 = arith.constant 0 : i32
    %c0_i32_1 = arith.constant 0 : i32
    return %arg0, %c0_i32, %c0_i32_0 : i32, i32, i32
  }
}

</mosaic_0001>

<llo_original>
// kernel: tpu_custom_call.1
$region0: #{tpu_custom_call.1}
  #allocation0 [shape = 'u32[]', space=smem, size = 0x4, offset = 0x4, fixed_abs, tag = 'smem constant byte address 0x4 - core index']
  #allocation1 [shape = 'u32[144,128]{1,0:T(1,128)}', space=vmem, size = 0x12000, scoped, tag = 'internal scratch']
  #allocation2 [shape = 's32[1]{0}', space=sflag, size = 0x4, scoped, tag = 'scoped memory for tpu_custom_call.1']
  #allocation3 [shape = 's32[1]{0:T(128)S(6)}', space=smem, size = 0x200, scoped, tag = 'prefetched SMEM operand 0']
  %s0 = inlined_call_operand.<no memory space> [shape: s32[1], index: 0, kind: input, shape index: {}]
  %s1 = inlined_call_operand.vmem [shape: f32[2,12,128], index: 1, kind: input, shape index: {}]
  %s2 = inlined_call_operand.vmem [shape: f32[2,4,128], index: 2, kind: input, shape index: {}]
  %s3 = inlined_call_operand.vmem [shape: s32[2,1,128], index: 3, kind: input, shape index: {}]
  %s4 = inlined_call_operand.hbm [shape: f32[2,1,128], index: 4, kind: output, shape index: {}]
  %s5 = sld [smem:[#allocation0]]
  $region52: #{tpu_custom_call.1} parent=0
    _
  %s7 = ssub.s32 1, %s5
  %s8 = scalar_select 0, %s7, %s5
  %9 = sst [smem:[#allocation3]] %s0
  $region1: #{tpu_custom_call.1} parent=0
    #allocation4 [shape = 'u8[1024]{0}', space=vmem, size = 0x400, scoped, tag = 'output window, operand 0']
    #allocation5 [shape = 's32[2]{0}', space=sflag, size = 0x8, scoped, tag = 'scoped memory for tpu_custom_call.1']
    %10 = vsyncpa [#allocation5], 0
    %s11 = scalar_lea.sflag [#allocation5], 1
    %12 = vsyncpa %s11, 0
    loop: start=0, step=1, limit=4
    $region2: #{tpu_custom_call.1} parent=1 // loop_pre_header
      _
    $region3: #{tpu_custom_call.1} parent=1 // loop_header
      %s14 = sphi 0, %s18
      %p15 = scmp.ge.s32.totalorder %s14, 4
      %s24 = sphi 0, %s26
      %s27 = sphi 0, %s24
      %s28 = sphi 0, %s27
      %s44 = sphi 0, %s28
      %s50 = sphi 0, %s52
      %s53 = sphi 0, %s50
      %s54 = sphi 0, %s53
      %s70 = sphi 0, %s54
      %s76 = sphi 0, %s78
      %s79 = sphi 0, %s76
      %s80 = sphi 0, %s79
      %s96 = sphi 0, %s80
      %s102 = sphi 0, %s104
      %s105 = sphi 0, %s102
      %s106 = sphi 0, %s105
      %s122 = sphi 0, %s106
    $region4: #{tpu_custom_call.1} parent=1 // loop_header_branch
      %17 = sbr.rel (%p15) target = $region8
    $region5: #{tpu_custom_call.1} parent=1 // loop_body
      %s19 = ssub.s32 %s14, 1
      %s20 = ssub.s32 %s14, 2
      %s21 = sadd.s32 %s14, 1
      %s22 = ssub.s32 %s14, %s21
      %p23 = scmp.eq.s32.totalorder %s22, 0
      %s25 = sadd.s32 %s24, 1
      %s26 = scalar_select %p23, %s24, %s25
      %p29 = pneg %p23
      %p30 = scmp.eq.s32.totalorder %s14, 1
      %p31 = por %p29, %p30
      %p32 = scmp.ne.s32.totalorder %s24, %s27
      %p33 = scmp.eq.s32.totalorder %s14, 0
      %p34 = por %p32, %p33
      %p35 = scmp.ne.s32.totalorder %s24, %s27
      %p36 = scmp.eq.s32.totalorder %s19, 1
      %p37 = por %p35, %p36
      %p38 = scmp.ne.s32.totalorder %s27, %s28
      %p39 = scmp.eq.s32.totalorder %s19, 0
      %p40 = por %p38, %p39
      %p41 = scmp.ne.s32.totalorder %s27, %s28
      %p42 = scmp.eq.s32.totalorder %s20, 1
      %p43 = por %p41, %p42
      %p45 = scmp.ne.s32.totalorder %s28, %s44
      %p46 = scmp.eq.s32.totalorder %s20, 0
      %p47 = por %p45, %p46
      %s48 = ssub.s32 %s14, %s21
      %p49 = scmp.eq.s32.totalorder %s48, 0
      %s51 = sadd.s32 %s50, 1
      %s52 = scalar_select %p49, %s50, %s51
      %p55 = pneg %p49
      %p56 = scmp.eq.s32.totalorder %s14, 1
      %p57 = por %p55, %p56
      %p58 = scmp.ne.s32.totalorder %s50, %s53
      %p59 = scmp.eq.s32.totalorder %s14, 0
      %p60 = por %p58, %p59
      %p61 = scmp.ne.s32.totalorder %s50, %s53
      %p62 = scmp.eq.s32.totalorder %s19, 1
      %p63 = por %p61, %p62
      %p64 = scmp.ne.s32.totalorder %s53, %s54
      %p65 = scmp.eq.s32.totalorder %s19, 0
      %p66 = por %p64, %p65
      %p67 = scmp.ne.s32.totalorder %s53, %s54
      %p68 = scmp.eq.s32.totalorder %s20, 1
      %p69 = por %p67, %p68
      %p71 = scmp.ne.s32.totalorder %s54, %s70
      %p72 = scmp.eq.s32.totalorder %s20, 0
      %p73 = por %p71, %p72
      %s74 = ssub.s32 %s14, %s21
      %p75 = scmp.eq.s32.totalorder %s74, 0
      %s77 = sadd.s32 %s76, 1
      %s78 = scalar_select %p75, %s76, %s77
      %p81 = pneg %p75
      %p82 = scmp.eq.s32.totalorder %s14, 1
      %p83 = por %p81, %p82
      %p84 = scmp.ne.s32.totalorder %s76, %s79
      %p85 = scmp.eq.s32.totalorder %s14, 0
      %p86 = por %p84, %p85
      %p87 = scmp.ne.s32.totalorder %s76, %s79
      %p88 = scmp.eq.s32.totalorder %s19, 1
      %p89 = por %p87, %p88
      %p90 = scmp.ne.s32.totalorder %s79, %s80
      %p91 = scmp.eq.s32.totalorder %s19, 0
      %p92 = por %p90, %p91
      %p93 = scmp.ne.s32.totalorder %s79, %s80
      %p94 = scmp.eq.s32.totalorder %s20, 1
      %p95 = por %p93, %p94
      %p97 = scmp.ne.s32.totalorder %s80, %s96
      %p98 = scmp.eq.s32.totalorder %s20, 0
      %p99 = por %p97, %p98
      %s100 = ssub.s32 %s14, %s21
      %p101 = scmp.eq.s32.totalorder %s100, 0
      %s103 = sadd.s32 %s102, 1
      %s104 = scalar_select %p101, %s102, %s103
      %p107 = pneg %p101
      %p108 = scmp.eq.s32.totalorder %s14, 1
      %p109 = por %p107, %p108
      %p110 = scmp.ne.s32.totalorder %s102, %s105
      %p111 = scmp.eq.s32.totalorder %s14, 0
      %p112 = por %p110, %p111
      %p113 = scmp.ne.s32.totalorder %s102, %s105
      %p114 = scmp.eq.s32.totalorder %s19, 1
      %p115 = por %p113, %p114
      %p116 = scmp.ne.s32.totalorder %s105, %s106
      %p117 = scmp.eq.s32.totalorder %s19, 0
      %p118 = por %p116, %p117
      %p119 = scmp.ne.s32.totalorder %s105, %s106
      %p120 = scmp.eq.s32.totalorder %s20, 1
      %p121 = por %p119, %p120
      %p123 = scmp.ne.s32.totalorder %s106, %s122
      %p124 = scmp.eq.s32.totalorder %s20, 0
      %p125 = por %p123, %p124
      %p126 = scmp.le.s32.totalorder 1, %s14
      %p127 = scmp.lt.s32.totalorder %s14, 3
      %p128 = pnand %p126, %p127
      %p129 = pneg %p128
      // Predicated region
      $region9: #{tpu_custom_call.1} parent=5 // pred_check
        _
      $region10: #{tpu_custom_call.1} parent=5 // pred_check_branch
        %131 = sbr.rel (%p128) target = $region12
      $region11: #{tpu_custom_call.1} parent=5 // pred_region
        %s132 = ssub.s32 %s14, 1
      $region12: #{tpu_custom_call.1} parent=5 // pred_fallthru
        _
      %p133 = scmp.lt.s32.totalorder %s14, 2
      // Predicated region
      $region13: #{tpu_custom_call.1} parent=5 // pred_check
        %p134 = pneg %p133
      $region14: #{tpu_custom_call.1} parent=5 // pred_check_branch
        %136 = sbr.rel (%p134) target = $region16
      $region15: #{tpu_custom_call.1} parent=5 // pred_region
        // Predicated region
        $region17: #{tpu_custom_call.1} parent=15 // pred_check
          %p137 = pneg %p34
        $region18: #{tpu_custom_call.1} parent=15 // pred_check_branch
          %139 = sbr.rel (%p137) target = $region20
        $region19: #{tpu_custom_call.1} parent=15 // pred_region
          %p140 = scmp.lt.s32.totalorder %s14, 1
          %s141 = scalar_select %p140, %s14, 1
          %s142 = smul.addr %s141, 2
          %s143 = smul.addr %s142, 8
          %s144 = scalar_lea.vmem %s1, %s143
        $region20: #{tpu_custom_call.1} parent=15 // pred_fallthru
          _
        // Predicated region
        $region21: #{tpu_custom_call.1} parent=15 // pred_check
          %p145 = pneg %p60
        $region22: #{tpu_custom_call.1} parent=15 // pred_check_branch
          %147 = sbr.rel (%p145) target = $region24
        $region23: #{tpu_custom_call.1} parent=15 // pred_region
          %p148 = scmp.lt.s32.totalorder %s14, 1
          %s149 = scalar_select %p148, %s14, 1
          %s150 = smul.addr %s149, 4
          %s151 = scalar_lea.vmem %s2, %s150
        $region24: #{tpu_custom_call.1} parent=15 // pred_fallthru
          _
        // Predicated region
        $region25: #{tpu_custom_call.1} parent=15 // pred_check
          %p152 = pneg %p86
        $region26: #{tpu_custom_call.1} parent=15 // pred_check_branch
          %154 = sbr.rel (%p152) target = $region28
        $region27: #{tpu_custom_call.1} parent=15 // pred_region
          %p155 = scmp.lt.s32.totalorder %s14, 1
          %s156 = scalar_select %p155, %s14, 1
          %s157 = scalar_lea.vmem %s3, %s156
        $region28: #{tpu_custom_call.1} parent=15 // pred_fallthru
          _
      $region16: #{tpu_custom_call.1} parent=5 // pred_fallthru
        _
      %p158 = scmp.le.s32.totalorder 1, %s14
      %p159 = scmp.lt.s32.totalorder %s14, 3
      %p160 = pnand %p158, %p159
      %p161 = pneg %p160
      // Predicated region
      $region29: #{tpu_custom_call.1} parent=5 // pred_check
        _
      $region30: #{tpu_custom_call.1} parent=5 // pred_check_branch
        %163 = sbr.rel (%p160) target = $region32
      $region31: #{tpu_custom_call.1} parent=5 // pred_region
        %s164 = ssub.s32 %s14, 1
        %p165 = scmp.lt.s32.totalorder %s19, 1
        %s166 = scalar_select %p165, %s19, 1
        %s167 = smul.addr %s166, 2
        %s168 = smul.addr %s167, 8
        %s169 = scalar_lea.vmem %s1, %s168
        %p170 = pneg %p40
        %p171 = pneg %p37
        %p172 = scmp.lt.s32.totalorder %s19, 1
        %s173 = scalar_select %p172, %s19, 1
        %s174 = smul.addr %s173, 4
        %s175 = scalar_lea.vmem %s2, %s174
        %p176 = pneg %p66
        %p177 = pneg %p63
        %p178 = scmp.lt.s32.totalorder %s19, 1
        %s179 = scalar_select %p178, %s19, 1
        %s180 = scalar_lea.vmem %s3, %s179
        %p181 = pneg %p92
        %p182 = pneg %p89
        %p183 = pneg %p118
        %p184 = pneg %p115
        %s185 = sand.u32 %s105, 1
        %s186 = scalar_lea.sflag [#allocation5], %s185
        %s187 = sand.u32 %s105, 1
        %s188 = scalar_lea.vmem [#allocation4], %s187
        %p189 = scmp.lt.s32.totalorder %s19, 1
        %s190 = scalar_select %p189, %s19, 1
        %s191 = smul.addr %s190, 2
        %s192 = smul.addr %s191, 8
        %s193 = scalar_lea.vmem %s1, %s192
        %p194 = scmp.lt.s32.totalorder %s19, 1
        %s195 = scalar_select %p194, %s19, 1
        %s196 = smul.addr %s195, 4
        %s197 = scalar_lea.vmem %s2, %s196
        %p198 = scmp.lt.s32.totalorder %s19, 1
        %s199 = scalar_select %p198, %s19, 1
        %s200 = scalar_lea.vmem %s3, %s199
        %v201 = vld [vmem:[%s193] sm:$0xff]
        %v202 = vld [vmem:[%s193 + $0x8] sm:$0xf]
        %v203 = vld [vmem:[%s200] sm:$0x1]
        %vm204 = vcmp.gt.s32.totalorder %v203, 0
        %v205 = vsel %vm204, 1, 0
        %v206 = vcvt.s32.f32 %v205
        %v207 = vld [vmem:[%s197] sm:$0xf]
        %v208 = vsub.f32 %v201, %v207
        %v209 = vand.u32 2147483647, %v208
        %vm210 = vcmp.lt.f32.partialorder %v209, 1.0
        %v211 = vmul.f32 %v208, 0.5
        %v212 = vmul.f32 %v211, %v208
        %v213 = vsub.f32 %v209, 0.5
        %v214 = vsel %vm210, %v212, %v213
        %vm215 = vcmask 1043456
        %v216 = vsel %vm215, %v214, 0.0
        %v217 = vrot.slane %v216, 4
        %v218 = vadd.f32 %v216, %v217
        %v219 = vrot.slane %v218, 2
        %v220 = vadd.f32 %v218, %v219
        %v221 = vrot.slane %v220, 1
        %v222 = vadd.f32 %v220, %v221
        %v223 = vmul.f32 %v222, %v206
        %vm224 = vcmask 1040384
        %v225 = vsel %vm224, %v223, 0.0
        %226 = vadd.xlane.f32.xlu0 %v225
        %v227 = vpop.xlane.xlu0 %226
        %v228 = vrot.slane %v227, 4
        %v229 = vadd.f32 %v227, %v228
        %v230 = vrot.slane %v229, 2
        %v231 = vadd.f32 %v229, %v230
        %v232 = vrot.slane %v231, 1
        %v233 = vadd.f32 %v231, %v232
        %s234 = vtos %v233
        %vm235 = vcmask 1047556
        %v236 = vsel %vm235, %v201, -inf
        %v237 = vsel %vm215, %v202, -inf
        %v238 = vmax.f32 %v236, %v237
        %v239 = vrot.slane %v238, 4
        %v240 = vmax.f32 %v238, %v239
        %v241 = vrot.slane %v240, 2
        %v242 = vmax.f32 %v240, %v241
        %v243 = vrot.slane %v242, 1
        %v244 = vmax.f32 %v242, %v243
        %v245 = vsub.f32 %v201, %v244
        %v246 = vsub.f32 %v202, %v244
        %v247 = vmul.f32 %v245, 1.442695
        %v248 = vpow.pop %v247
        %v249 = vmul.f32 %v246, 1.442695
        %v250 = vpow.pop %v249
        %v253 = vrot.slane %v248, 4
        %v254 = vrot.slane %v250, 4
        %v255 = vsel %vm215, %v253, %v254
        %v257 = vrot.slane %v255, 4
        %v258 = vadd.f32 %v255, %v257
        %v259 = vrot.slane %v258, 2
        %v260 = vadd.f32 %v258, %v259
        %v261 = vrot.slane %v260, 1
        %v262 = vadd.f32 %v260, %v261
        %v263 = vlaneseq
        %v264 = vshrl.u32 %v263, 7
        %v265 = vlaneseq
        %v266 = vshrl.u32 %v265, 7
        %v267 = vsub.s32 0, %v266
        %v268 = vrot.slane %v203, %v267
        %vm269 = vcmp.eq.s32.totalorder %v264, %v268
        %v272 = vrot.slane %v245, 4
        %v273 = vrot.slane %v246, 4
        %v274 = vsel %vm215, %v272, %v273
        %v276 = vsel %vm269, %v274, 0.0
        %v277 = vrot.slane %v276, 4
        %v278 = vadd.f32 %v276, %v277
        %v279 = vrot.slane %v278, 2
        %v280 = vadd.f32 %v278, %v279
        %v281 = vrot.slane %v280, 1
        %v282 = vadd.f32 %v280, %v281
        %v283 = vlog2.pop %v262
        %v284 = vmul.f32 %v283, 0.6931472
        %v285 = vsub.f32 %v284, %v282
        %v286 = vsel %vm204, 0.0, %v285
        %s288 = sld [smem:[#allocation3]]
        %p289 = scmp.gt.s32.totalorder %s288, 1
        %s290 = scalar_select %p289, %s288, 1
        loop: start=0, step=1, limit=32
        $region33: #{tpu_custom_call.1} parent=31 // loop_pre_header
          _
        $region34: #{tpu_custom_call.1} parent=31 // loop_header
          %s292 = sphi 0, %s296
          %p293 = scmp.ge.s32.totalorder %s292, 32
          %v297 = vphi 0, %v319
          %v298 = vphi 2139095040, %v320
        $region35: #{tpu_custom_call.1} parent=31 // loop_header_branch
          %295 = sbr.rel (%p293) target = $region39
        $region36: #{tpu_custom_call.1} parent=31 // loop_body
          %v299 = vsub.s32 %v298, %v297
          %v300 = vshra.s32 %v299, 1
          %v301 = vadd.s32 %v297, %v300
          %vm302 = vcmp.ge.s32.totalorder %v286, %v301
          %v303 = vsel %vm302, 1, 0
          %v304 = vsel %vm224, %v303, 0
          %v305 = vand.u32 %v304, 65535
          %v306 = vshrl.u32 %v304, 16
          %v307 = vcvt.s32.f32 %v305
          %v308 = vcvt.s32.f32 %v306
          %309 = vadd.xlane.f32.xlu0 %v307
          %v310 = vpop.xlane.xlu0 %309
          %311 = vadd.xlane.f32.xlu0 %v308
          %v312 = vpop.xlane.xlu0 %311
          %v313 = vcvt.f32.s32 %v310
          %v314 = vcvt.f32.s32 %v312
          %v315 = vshll.u32 %v314, 16
          %v316 = vadd.s32 %v315, %v313
          %v317 = vstv %s290
          %vm318 = vcmp.ge.s32.totalorder %v316, %v317
          %v319 = vsel %vm318, %v301, %v297
          %v320 = vsel %vm318, %v298, %v301
        $region37: #{tpu_custom_call.1} parent=31 // loop_footer
          %s296 = sadd.s32 1, %s292
        $region38: #{tpu_custom_call.1} parent=31 // loop_footer_branch
          %291 = sbr.rel target = $region34
        $region39: #{tpu_custom_call.1} parent=31 // loop_exit
          _
        %vm321 = vcmp.ge.s32.totalorder %v286, %v297
        %p322 = scmp.gt.s32.totalorder %s288, 0
        %s323 = scalar_select %p322, 1, 0
        %v324 = vstv %s323
        %vm325 = vcmp.eq.s32.totalorder %v324, 1
        %vm326 = vmand %vm321, %vm325
        %vm327 = vmor %vm204, %vm326
        %v328 = vsel %vm327, 1, 0
        %v329 = vcvt.s32.f32 %v328
        %v330 = vmul.f32 %v285, %v329
        %v331 = vsel %vm224, %v330, 0.0
        %332 = vadd.xlane.f32.xlu0 %v331
        %v333 = vpop.xlane.xlu0 %332
        %v334 = vrot.slane %v333, 4
        %v335 = vadd.f32 %v333, %v334
        %v336 = vrot.slane %v335, 2
        %v337 = vadd.f32 %v335, %v336
        %v338 = vrot.slane %v337, 1
        %v339 = vadd.f32 %v337, %v338
        %s340 = vtos %v339
        %v341 = vsel %vm224, %v329, 0.0
        %342 = vadd.xlane.f32.xlu0 %v341
        %v343 = vpop.xlane.xlu0 %342
        %v344 = vrot.slane %v343, 4
        %v345 = vadd.f32 %v343, %v344
        %v346 = vrot.slane %v345, 2
        %v347 = vadd.f32 %v345, %v346
        %v348 = vrot.slane %v347, 1
        %v349 = vadd.f32 %v347, %v348
        %s350 = vtos %v349
        %v351 = vlaneseq
        %v352 = vand.u32 %v351, 127
        %vm353 = vcmp.eq.s32.totalorder %v352, 0
        %vm354 = vcmp.eq.s32.totalorder %v352, 1
        %vm355 = vcmp.eq.s32.totalorder %v352, 2
        %v356 = vstv %s350
        %v357 = vsel %vm355, %v356, 0.0
        %v358 = vstv %s340
        %v359 = vsel %vm354, %v358, %v357
        %v360 = vstv %s234
        %v361 = vsel %vm353, %v360, %v359
        %362 = vst [vmem:[%s188] sm:$0x1] %v361
        %s363 = sand.u32 %s105, 1
        %s364 = scalar_lea.sflag [#allocation5], %s363
        %s365 = sand.u32 %s105, 1
        %s366 = scalar_lea.vmem [#allocation4], %s365
        // Predicated region
        $region40: #{tpu_custom_call.1} parent=31 // pred_check
          %p367 = pneg %p115
        $region41: #{tpu_custom_call.1} parent=31 // pred_check_branch
          %369 = sbr.rel (%p367) target = $region43
        $region42: #{tpu_custom_call.1} parent=31 // pred_region
          %s371 = ssub.s32 16, 16
          %372 = vsyncadd %s364, %s371
          %s373 = smul.addr %s19, 16
          %s374 = scalar_lea.hbm %s4, %s373
          %s376 = sshll.u32 %s366, 4
          %s377 = int_to_ptr.vmem [resolvable:$true] %s376
          %379 = dma.vmem_to_hbm [thread:$0]  %s377, 16, %s374, %s364
        $region43: #{tpu_custom_call.1} parent=31 // pred_fallthru
          _
      $region32: #{tpu_custom_call.1} parent=5 // pred_fallthru
        _
      %p380 = scmp.le.s32.totalorder 2, %s14
      // Predicated region
      $region44: #{tpu_custom_call.1} parent=5 // pred_check
        %p381 = pneg %p380
      $region45: #{tpu_custom_call.1} parent=5 // pred_check_branch
        %383 = sbr.rel (%p381) target = $region47
      $region46: #{tpu_custom_call.1} parent=5 // pred_region
        %s384 = ssub.s32 %s14, 2
        // Predicated region
        $region48: #{tpu_custom_call.1} parent=46 // pred_check
          %p385 = pneg %p121
        $region49: #{tpu_custom_call.1} parent=46 // pred_check_branch
          %387 = sbr.rel (%p385) target = $region51
        $region50: #{tpu_custom_call.1} parent=46 // pred_region
          %s388 = sand.u32 %s106, 1
          %s389 = scalar_lea.sflag [#allocation5], %s388
          %s390 = sand.u32 %s106, 1
          %s391 = scalar_lea.vmem [#allocation4], %s390
          %392 = dma.done %s389, 16
        $region51: #{tpu_custom_call.1} parent=46 // pred_fallthru
          _
      $region47: #{tpu_custom_call.1} parent=5 // pred_fallthru
        _
    $region6: #{tpu_custom_call.1} parent=1 // loop_footer
      %s18 = sadd.s32 1, %s14
    $region7: #{tpu_custom_call.1} parent=1 // loop_footer_branch
      %13 = sbr.rel target = $region3
    $region8: #{tpu_custom_call.1} parent=1 // loop_exit
      _
    %393 = vsyncpa [#allocation5], 1
    %s394 = scalar_lea.sflag [#allocation5], 1
    %395 = vsyncpa %s394, 1

</llo_original>
